<compile_context>
chip_gen: v7x
topology: tpu7x:2x2x1
jax: 0.10.0
libtpu: 0.0.40
codegen_flags: <defaults>
</compile_context>

<pallas_src>
import jax
import jax.numpy as jnp
from jax.experimental import pallas as pl
from jax.experimental.pallas import tpu as pltpu

INPUT_SIZE = 1024
H1 = 128
H2 = 64
OUTPUT_SIZE = 2
TILE_B = 1024          # fits ~9 MiB VMEM incl. double buffers (v5e-safe)


def _round_up(n, m):
    return ((n + m - 1) // m) * m


def _pick_tile_b(batch):
    # Keep >=4 grid steps for large batches (v7x dual-TC); cap at TILE_B.
    t = _round_up(pl.cdiv(batch, 4), 16)
    return int(min(TILE_B, max(16, t)))


def _mlp_kernel(x_ref, w1_ref, b1_ref, w2_ref, b2_ref, w3_ref, b3_ref, o_ref):
    # In-kernel bf16 cast of the streamed f32 x tile (hidden under the x DMA).
    x = x_ref[...].astype(jnp.bfloat16)
    # Layer 1: (TB, 1024)[bf16] @ (1024, 128)[bf16] -> f32 acc, +b1, ReLU
    h1 = jnp.dot(x, w1_ref[...], preferred_element_type=jnp.float32)
    h1 = jnp.maximum(h1 + b1_ref[...], 0.0)
    # Layer 2: (TB, 128)[bf16] @ (128, 64)[bf16] -> f32, +b2, ReLU
    h2 = jnp.dot(h1.astype(jnp.bfloat16), w2_ref[...],
                 preferred_element_type=jnp.float32)
    h2 = jnp.maximum(h2 + b2_ref[...], 0.0)
    # Layer 3: (TB, 64)[bf16] @ (64, 2)[bf16] -> f32, +b3, tanh
    h3 = jnp.dot(h2.astype(jnp.bfloat16), w3_ref[...],
                 preferred_element_type=jnp.float32)
    o_ref[...] = jnp.tanh(h3 + b3_ref[...]).astype(o_ref.dtype)


def mouse_action_nn(x, params, tile_b=None):
    """Fused MLP forward. x: (B, 1024) float32. Returns (B, 2) float32."""
    w1, b1, w2, b2, w3, b3 = params
    B = x.shape[0]

    if tile_b is None:
        tile_b = _pick_tile_b(B)
    tile_b = max(16, _round_up(int(tile_b), 16))

    # bf16 weights for MXU (one-off, tiny); biases stay f32.
    w1_bf = w1.astype(jnp.bfloat16)
    w2_bf = w2.astype(jnp.bfloat16)
    w3_bf = w3.astype(jnp.bfloat16)

    grid = (pl.cdiv(B, tile_b),)     # ragged last block handled by Pallas
    const = lambda i: (0, 0)         # weights/biases: fetched once, resident

    flops = 2 * B * (INPUT_SIZE * H1 + H1 * H2 + H2 * OUTPUT_SIZE)
    bytes_accessed = (x.size * 4
                      + 2 * (w1_bf.size + w2_bf.size + w3_bf.size)
                      + 4 * (b1.size + b2.size + b3.size)
                      + 4 * B * OUTPUT_SIZE)

    out = pl.pallas_call(
        _mlp_kernel,
        out_shape=jax.ShapeDtypeStruct((B, OUTPUT_SIZE), jnp.float32),
        grid=grid,
        in_specs=[
            pl.BlockSpec((tile_b, INPUT_SIZE), lambda i: (i, 0)),  # x (f32, streamed)
            pl.BlockSpec((INPUT_SIZE, H1), const),                 # w1 (bf16)
            pl.BlockSpec((1, H1), const),                          # b1 (f32)
            pl.BlockSpec((H1, H2), const),                         # w2 (bf16)
            pl.BlockSpec((1, H2), const),                          # b2 (f32)
            pl.BlockSpec((H2, OUTPUT_SIZE), const),                # w3 (bf16)
            pl.BlockSpec((1, OUTPUT_SIZE), const),                 # b3 (f32)
        ],
        out_specs=pl.BlockSpec((tile_b, OUTPUT_SIZE), lambda i: (i, 0)),
        compiler_params=pltpu.CompilerParams(
            dimension_semantics=("parallel",)),
        cost_estimate=pl.CostEstimate(
            flops=flops,
            transcendentals=B * OUTPUT_SIZE,
            bytes_accessed=bytes_accessed),
    )(x, w1_bf, b1, w2_bf, b2, w3_bf, b3)

    return out


def init_params(key):
    """Deterministic PyTorch-style (uniform +/- 1/sqrt(fan_in)) init."""
    ks = jax.random.split(key, 6)

    def linear_init(kw, kb, fan_in, fan_out):
        bound = 1.0 / jnp.sqrt(float(fan_in))
        # weight stored as (in, out) == transposed PyTorch layout
        w = jax.random.uniform(kw, (fan_in, fan_out), jnp.float32, -bound, bound)
        b = jax.random.uniform(kb, (1, fan_out), jnp.float32, -bound, bound)
        return w, b

    w1, b1 = linear_init(ks[0], ks[1], INPUT_SIZE, H1)
    w2, b2 = linear_init(ks[2], ks[3], H1, H2)
    w3, b3 = linear_init(ks[4], ks[5], H2, OUTPUT_SIZE)
    return (w1, b1, w2, b2, w3, b3)


def reference_forward(x, params):
    """Pure-JAX f32 reference matching PyTorch semantics."""
    w1, b1, w2, b2, w3, b3 = params
    h = jnp.maximum(x @ w1 + b1, 0.0)
    h = jnp.maximum(h @ w2 + b2, 0.0)
    return jnp.tanh(h @ w3 + b3)


if __name__ == "__main__":
    key = jax.random.PRNGKey(0)
    k_params, k_x = jax.random.split(key)
    params = init_params(k_params)

    batch = 37  # deliberately not a multiple of the tile -> ragged last block
    x = jax.random.normal(k_x, (batch, INPUT_SIZE), jnp.float32)
    ref = reference_forward(x, params)

    # Small tile forces a multi-step grid with a partial final block.
    out = jax.block_until_ready(mouse_action_nn(x, params, tile_b=16))
    assert out.shape == (batch, OUTPUT_SIZE)
    # bf16 matmul inputs with f32 accumulation -> relaxed tolerance vs f32 ref.
    assert jnp.allclose(out, ref, atol=1e-2, rtol=1e-2), float(
        jnp.max(jnp.abs(out - ref)))

    # Default tile selection path.
    out_default = jax.block_until_ready(mouse_action_nn(x, params))
    assert out_default.shape == (batch, OUTPUT_SIZE)
    assert jnp.allclose(out_default, ref, atol=1e-2, rtol=1e-2)

    print("KERNEL_OK")
</pallas_src>

<mosaic_0001>
module attributes {stable_mosaic.version = 11 : i64} {
  func.func @_mlp_kernel(%arg0: i32, %arg1: memref<16x1024xf32, #tpu.memory_space<vmem>>, %arg2: memref<1024x128xbf16, #tpu.memory_space<vmem>>, %arg3: memref<1x128xf32, #tpu.memory_space<vmem>>, %arg4: memref<128x64xbf16, #tpu.memory_space<vmem>>, %arg5: memref<1x64xf32, #tpu.memory_space<vmem>>, %arg6: memref<64x2xbf16, #tpu.memory_space<vmem>>, %arg7: memref<1x2xf32, #tpu.memory_space<vmem>>, %arg8: memref<16x2xf32, #tpu.memory_space<vmem>>) attributes {dimension_semantics = [#tpu.dimension_semantics<parallel>], iteration_bounds = array<i64: 3>, scalar_prefetch = 0 : i64, scratch_operands = 0 : i64, tpu.core_type = #tpu.core_type<tc>, window_params = [{transform_indices = @transform_0, window_bounds = array<i64: 16, 1024>}, {pipeline_mode = #tpu.pipeline_mode<synchronous>, transform_indices = @transform_1, window_bounds = array<i64: 1024, 128>}, {pipeline_mode = #tpu.pipeline_mode<synchronous>, transform_indices = @transform_2, window_bounds = array<i64: 1, 128>}, {pipeline_mode = #tpu.pipeline_mode<synchronous>, transform_indices = @transform_3, window_bounds = array<i64: 128, 64>}, {pipeline_mode = #tpu.pipeline_mode<synchronous>, transform_indices = @transform_4, window_bounds = array<i64: 1, 64>}, {pipeline_mode = #tpu.pipeline_mode<synchronous>, transform_indices = @transform_5, window_bounds = array<i64: 64, 2>}, {pipeline_mode = #tpu.pipeline_mode<synchronous>, transform_indices = @transform_6, window_bounds = array<i64: 1, 2>}, {transform_indices = @transform_7, window_bounds = array<i64: 16, 2>}]} {
    %c0 = arith.constant 0 : index
    %c0_0 = arith.constant 0 : index
    %0 = vector.load %arg1[%c0, %c0_0] : memref<16x1024xf32, #tpu.memory_space<vmem>>, vector<16x1024xf32>
    %1 = arith.truncf %0 : vector<16x1024xf32> to vector<16x1024xbf16>
    %c0_1 = arith.constant 0 : index
    %c0_2 = arith.constant 0 : index
    %2 = vector.load %arg2[%c0_1, %c0_2] : memref<1024x128xbf16, #tpu.memory_space<vmem>>, vector<1024x128xbf16>
    %cst = arith.constant dense<0.000000e+00> : vector<16x128xf32>
    %3 = tpu.matmul %1, %2, %cst {dimension_numbers = #tpu.dot_dimension_numbers<[1], [0], [0], [1], [0, 0, 1, 1], [], []>} : vector<16x1024xbf16>, vector<1024x128xbf16>, vector<16x128xf32> -> vector<16x128xf32>
    %c0_3 = arith.constant 0 : index
    %c0_4 = arith.constant 0 : index
    %4 = vector.load %arg3[%c0_3, %c0_4] : memref<1x128xf32, #tpu.memory_space<vmem>>, vector<1x128xf32>
    %5 = vector.broadcast %4 : vector<1x128xf32> to vector<16x128xf32>
    %6 = arith.addf %3, %5 : vector<16x128xf32>
    %cst_5 = arith.constant 0.000000e+00 : f32
    %7 = vector.broadcast %cst_5 : f32 to vector<16x128xf32>
    %8 = arith.maximumf %6, %7 : vector<16x128xf32>
    %9 = arith.truncf %8 : vector<16x128xf32> to vector<16x128xbf16>
    %c0_6 = arith.constant 0 : index
    %c0_7 = arith.constant 0 : index
    %10 = vector.load %arg4[%c0_6, %c0_7] : memref<128x64xbf16, #tpu.memory_space<vmem>>, vector<128x64xbf16>
    %cst_8 = arith.constant dense<0.000000e+00> : vector<16x64xf32>
    %11 = tpu.matmul %9, %10, %cst_8 {dimension_numbers = #tpu.dot_dimension_numbers<[1], [0], [0], [1], [0, 0, 1, 1], [], []>} : vector<16x128xbf16>, vector<128x64xbf16>, vector<16x64xf32> -> vector<16x64xf32>
    %c0_9 = arith.constant 0 : index
    %c0_10 = arith.constant 0 : index
    %12 = vector.load %arg5[%c0_9, %c0_10] : memref<1x64xf32, #tpu.memory_space<vmem>>, vector<1x64xf32>
    %13 = vector.broadcast %12 : vector<1x64xf32> to vector<16x64xf32>
    %14 = arith.addf %11, %13 : vector<16x64xf32>
    %cst_11 = arith.constant 0.000000e+00 : f32
    %15 = vector.broadcast %cst_11 : f32 to vector<16x64xf32>
    %16 = arith.maximumf %14, %15 : vector<16x64xf32>
    %17 = arith.truncf %16 : vector<16x64xf32> to vector<16x64xbf16>
    %c0_12 = arith.constant 0 : index
    %c0_13 = arith.constant 0 : index
    %18 = vector.load %arg6[%c0_12, %c0_13] : memref<64x2xbf16, #tpu.memory_space<vmem>>, vector<64x2xbf16>
    %cst_14 = arith.constant dense<0.000000e+00> : vector<16x2xf32>
    %19 = tpu.matmul %17, %18, %cst_14 {dimension_numbers = #tpu.dot_dimension_numbers<[1], [0], [0], [1], [0, 0, 1, 1], [], []>} : vector<16x64xbf16>, vector<64x2xbf16>, vector<16x2xf32> -> vector<16x2xf32>
    %c0_15 = arith.constant 0 : index
    %c0_16 = arith.constant 0 : index
    %20 = vector.load %arg7[%c0_15, %c0_16] : memref<1x2xf32, #tpu.memory_space<vmem>>, vector<1x2xf32>
    %21 = vector.broadcast %20 : vector<1x2xf32> to vector<16x2xf32>
    %22 = arith.addf %19, %21 : vector<16x2xf32>
    %23 = math.tanh %22 : vector<16x2xf32>
    %c0_17 = arith.constant 0 : index
    %c0_18 = arith.constant 0 : index
    %24 = vector.load %arg8[%c0_17, %c0_18] : memref<16x2xf32, #tpu.memory_space<vmem>>, vector<16x2xf32>
    tpu.vector_store %arg8[%c0_17, %c0_18], %23 {strides = array<i32>} : memref<16x2xf32, #tpu.memory_space<vmem>>, vector<16x2xf32>,
    return
  }
  func.func @transform_0(%arg0: i32) -> (i32, i32) {
    %c0_i32 = arith.constant 0 : i32
    %c0_i32_0 = arith.constant 0 : i32
    return %arg0, %c0_i32 : i32, i32
  }
  func.func @transform_1(%arg0: i32) -> (i32, i32) {
    %c0_i32 = arith.constant 0 : i32
    %c0_i32_0 = arith.constant 0 : i32
    %c0_i32_1 = arith.constant 0 : i32
    return %c0_i32, %c0_i32_0 : i32, i32
  }
  func.func @transform_2(%arg0: i32) -> (i32, i32) {
    %c0_i32 = arith.constant 0 : i32
    %c0_i32_0 = arith.constant 0 : i32
    %c0_i32_1 = arith.constant 0 : i32
    return %c0_i32, %c0_i32_0 : i32, i32
  }
  func.func @transform_3(%arg0: i32) -> (i32, i32) {
    %c0_i32 = arith.constant 0 : i32
    %c0_i32_0 = arith.constant 0 : i32
    %c0_i32_1 = arith.constant 0 : i32
    return %c0_i32, %c0_i32_0 : i32, i32
  }
  func.func @transform_4(%arg0: i32) -> (i32, i32) {
    %c0_i32 = arith.constant 0 : i32
    %c0_i32_0 = arith.constant 0 : i32
    %c0_i32_1 = arith.constant 0 : i32
    return %c0_i32, %c0_i32_0 : i32, i32
  }
  func.func @transform_5(%arg0: i32) -> (i32, i32) {
    %c0_i32 = arith.constant 0 : i32
    %c0_i32_0 = arith.constant 0 : i32
    %c0_i32_1 = arith.constant 0 : i32
    return %c0_i32, %c0_i32_0 : i32, i32
  }
  func.func @transform_6(%arg0: i32) -> (i32, i32) {
    %c0_i32 = arith.constant 0 : i32
    %c0_i32_0 = arith.constant 0 : i32
    %c0_i32_1 = arith.constant 0 : i32
    return %c0_i32, %c0_i32_0 : i32, i32
  }
  func.func @transform_7(%arg0: i32) -> (i32, i32) {
    %c0_i32 = arith.constant 0 : i32
    %c0_i32_0 = arith.constant 0 : i32
    return %arg0, %c0_i32 : i32, i32
  }
}

</mosaic_0001>

<llo_original>
// kernel: tpu_custom_call.1
$region0: #{tpu_custom_call.1}
  #allocation0 [shape = 'u32[]', space=smem, size = 0x4, offset = 0x4, fixed_abs, tag = 'smem constant byte address 0x4 - core index']
  #allocation1 [shape = 'u32[144,128]{1,0:T(1,128)}', space=vmem, size = 0x12000, scoped, tag = 'internal scratch']
  %s0 = inlined_call_operand.hbm [shape: f32[37,1024], index: 0, kind: input, shape index: {}]
  %s1 = inlined_call_operand.hbm [shape: bf16[1024,128], index: 1, kind: input, shape index: {}]
  %s2 = inlined_call_operand.vmem [shape: f32[1,128], index: 2, kind: input, shape index: {}]
  %s3 = inlined_call_operand.vmem [shape: bf16[128,64], index: 3, kind: input, shape index: {}]
  %s4 = inlined_call_operand.vmem [shape: f32[1,64], index: 4, kind: input, shape index: {}]
  %s5 = inlined_call_operand.vmem [shape: bf16[64,2], index: 5, kind: input, shape index: {}]
  %s6 = inlined_call_operand.vmem [shape: f32[1,2], index: 6, kind: input, shape index: {}]
  %s7 = inlined_call_operand.vmem [shape: f32[37,2], index: 7, kind: output, shape index: {}]
  %s8 = sld [smem:[#allocation0]]
  $region117: #{tpu_custom_call.1} parent=0
    _
  %s10 = ssub.s32 1, %s8
  %s11 = scalar_select 0, %s10, %s8
  $region1: #{tpu_custom_call.1} parent=0
    #allocation2 [shape = 'u8[131072]{0}', space=vmem, size = 0x20000, scoped, tag = 'input window, operand 0']
    #allocation3 [shape = 's32[2]{0}', space=sflag, size = 0x8, scoped, tag = 'scoped memory for tpu_custom_call.1']
    #allocation4 [shape = 'u8[262144]{0}', space=vmem, size = 0x40000, scoped, tag = 'input window, operand 1, single buffered']
    #allocation5 [shape = 's32[1]{0}', space=sflag, size = 0x4, scoped, tag = 'scoped memory for tpu_custom_call.1']
    #allocation6 [shape = 'u8[16384]{0}', space=vmem, size = 0x4000, scoped, tag = 'output window, operand 0']
    %12 = vsyncpa [#allocation3], 0
    %s13 = scalar_lea.sflag [#allocation3], 1
    %14 = vsyncpa %s13, 0
    %15 = vsyncpa [#allocation5], 0
    loop: start=0, step=1, limit=5
    $region2: #{tpu_custom_call.1} parent=1 // loop_pre_header
      _
    $region3: #{tpu_custom_call.1} parent=1 // loop_header
      %s17 = sphi 0, %s21
      %p18 = scmp.ge.s32.totalorder %s17, 5
      %s27 = sphi 0, %s29
      %s30 = sphi 0, %s27
      %s31 = sphi 0, %s30
      %s47 = sphi 0, %s31
      %s51 = sphi 0, %s51
      %s53 = sphi 0, %s51
      %s54 = sphi 0, %s53
      %s68 = sphi 0, %s54
      %s72 = sphi 0, %s72
      %s74 = sphi 0, %s72
      %s75 = sphi 0, %s74
      %s89 = sphi 0, %s75
      %s93 = sphi 0, %s93
      %s95 = sphi 0, %s93
      %s96 = sphi 0, %s95
      %s110 = sphi 0, %s96
      %s114 = sphi 0, %s114
      %s116 = sphi 0, %s114
      %s117 = sphi 0, %s116
      %s131 = sphi 0, %s117
      %s135 = sphi 0, %s135
      %s137 = sphi 0, %s135
      %s138 = sphi 0, %s137
      %s152 = sphi 0, %s138
      %s156 = sphi 0, %s156
      %s158 = sphi 0, %s156
      %s159 = sphi 0, %s158
      %s173 = sphi 0, %s159
      %s179 = sphi 0, %s181
      %s182 = sphi 0, %s179
      %s183 = sphi 0, %s182
      %s199 = sphi 0, %s183
    $region4: #{tpu_custom_call.1} parent=1 // loop_header_branch
      %20 = sbr.rel (%p18) target = $region8
    $region5: #{tpu_custom_call.1} parent=1 // loop_body
      %s22 = ssub.s32 %s17, 1
      %s23 = ssub.s32 %s17, 2
      %s24 = sadd.s32 %s17, 1
      %s25 = ssub.s32 %s17, %s24
      %p26 = scmp.eq.s32.totalorder %s25, 0
      %s28 = sadd.s32 %s27, 1
      %s29 = scalar_select %p26, %s27, %s28
      %p32 = pneg %p26
      %p33 = scmp.eq.s32.totalorder %s17, 2
      %p34 = por %p32, %p33
      %p35 = scmp.ne.s32.totalorder %s27, %s30
      %p36 = scmp.eq.s32.totalorder %s17, 0
      %p37 = por %p35, %p36
      %p38 = scmp.ne.s32.totalorder %s27, %s30
      %p39 = scmp.eq.s32.totalorder %s22, 2
      %p40 = por %p38, %p39
      %p41 = scmp.ne.s32.totalorder %s30, %s31
      %p42 = scmp.eq.s32.totalorder %s22, 0
      %p43 = por %p41, %p42
      %p44 = scmp.ne.s32.totalorder %s30, %s31
      %p45 = scmp.eq.s32.totalorder %s23, 2
      %p46 = por %p44, %p45
      %p48 = scmp.ne.s32.totalorder %s31, %s47
      %p49 = scmp.eq.s32.totalorder %s23, 0
      %p50 = por %p48, %p49
      %s52 = sadd.s32 %s51, 1
      %p55 = scmp.eq.s32.totalorder %s17, 2
      %p56 = scmp.ne.s32.totalorder %s51, %s53
      %p57 = scmp.eq.s32.totalorder %s17, 0
      %p58 = por %p56, %p57
      %p59 = scmp.ne.s32.totalorder %s51, %s53
      %p60 = scmp.eq.s32.totalorder %s22, 2
      %p61 = por %p59, %p60
      %p62 = scmp.ne.s32.totalorder %s53, %s54
      %p63 = scmp.eq.s32.totalorder %s22, 0
      %p64 = por %p62, %p63
      %p65 = scmp.ne.s32.totalorder %s53, %s54
      %p66 = scmp.eq.s32.totalorder %s23, 2
      %p67 = por %p65, %p66
      %p69 = scmp.ne.s32.totalorder %s54, %s68
      %p70 = scmp.eq.s32.totalorder %s23, 0
      %p71 = por %p69, %p70
      %s73 = sadd.s32 %s72, 1
      %p76 = scmp.eq.s32.totalorder %s17, 2
      %p77 = scmp.ne.s32.totalorder %s72, %s74
      %p78 = scmp.eq.s32.totalorder %s17, 0
      %p79 = por %p77, %p78
      %p80 = scmp.ne.s32.totalorder %s72, %s74
      %p81 = scmp.eq.s32.totalorder %s22, 2
      %p82 = por %p80, %p81
      %p83 = scmp.ne.s32.totalorder %s74, %s75
      %p84 = scmp.eq.s32.totalorder %s22, 0
      %p85 = por %p83, %p84
      %p86 = scmp.ne.s32.totalorder %s74, %s75
      %p87 = scmp.eq.s32.totalorder %s23, 2
      %p88 = por %p86, %p87
      %p90 = scmp.ne.s32.totalorder %s75, %s89
      %p91 = scmp.eq.s32.totalorder %s23, 0
      %p92 = por %p90, %p91
      %s94 = sadd.s32 %s93, 1
      %p97 = scmp.eq.s32.totalorder %s17, 2
      %p98 = scmp.ne.s32.totalorder %s93, %s95
      %p99 = scmp.eq.s32.totalorder %s17, 0
      %p100 = por %p98, %p99
      %p101 = scmp.ne.s32.totalorder %s93, %s95
      %p102 = scmp.eq.s32.totalorder %s22, 2
      %p103 = por %p101, %p102
      %p104 = scmp.ne.s32.totalorder %s95, %s96
      %p105 = scmp.eq.s32.totalorder %s22, 0
      %p106 = por %p104, %p105
      %p107 = scmp.ne.s32.totalorder %s95, %s96
      %p108 = scmp.eq.s32.totalorder %s23, 2
      %p109 = por %p107, %p108
      %p111 = scmp.ne.s32.totalorder %s96, %s110
      %p112 = scmp.eq.s32.totalorder %s23, 0
      %p113 = por %p111, %p112
      %s115 = sadd.s32 %s114, 1
      %p118 = scmp.eq.s32.totalorder %s17, 2
      %p119 = scmp.ne.s32.totalorder %s114, %s116
      %p120 = scmp.eq.s32.totalorder %s17, 0
      %p121 = por %p119, %p120
      %p122 = scmp.ne.s32.totalorder %s114, %s116
      %p123 = scmp.eq.s32.totalorder %s22, 2
      %p124 = por %p122, %p123
      %p125 = scmp.ne.s32.totalorder %s116, %s117
      %p126 = scmp.eq.s32.totalorder %s22, 0
      %p127 = por %p125, %p126
      %p128 = scmp.ne.s32.totalorder %s116, %s117
      %p129 = scmp.eq.s32.totalorder %s23, 2
      %p130 = por %p128, %p129
      %p132 = scmp.ne.s32.totalorder %s117, %s131
      %p133 = scmp.eq.s32.totalorder %s23, 0
      %p134 = por %p132, %p133
      %s136 = sadd.s32 %s135, 1
      %p139 = scmp.eq.s32.totalorder %s17, 2
      %p140 = scmp.ne.s32.totalorder %s135, %s137
      %p141 = scmp.eq.s32.totalorder %s17, 0
      %p142 = por %p140, %p141
      %p143 = scmp.ne.s32.totalorder %s135, %s137
      %p144 = scmp.eq.s32.totalorder %s22, 2
      %p145 = por %p143, %p144
      %p146 = scmp.ne.s32.totalorder %s137, %s138
      %p147 = scmp.eq.s32.totalorder %s22, 0
      %p148 = por %p146, %p147
      %p149 = scmp.ne.s32.totalorder %s137, %s138
      %p150 = scmp.eq.s32.totalorder %s23, 2
      %p151 = por %p149, %p150
      %p153 = scmp.ne.s32.totalorder %s138, %s152
      %p154 = scmp.eq.s32.totalorder %s23, 0
      %p155 = por %p153, %p154
      %s157 = sadd.s32 %s156, 1
      %p160 = scmp.eq.s32.totalorder %s17, 2
      %p161 = scmp.ne.s32.totalorder %s156, %s158
      %p162 = scmp.eq.s32.totalorder %s17, 0
      %p163 = por %p161, %p162
      %p164 = scmp.ne.s32.totalorder %s156, %s158
      %p165 = scmp.eq.s32.totalorder %s22, 2
      %p166 = por %p164, %p165
      %p167 = scmp.ne.s32.totalorder %s158, %s159
      %p168 = scmp.eq.s32.totalorder %s22, 0
      %p169 = por %p167, %p168
      %p170 = scmp.ne.s32.totalorder %s158, %s159
      %p171 = scmp.eq.s32.totalorder %s23, 2
      %p172 = por %p170, %p171
      %p174 = scmp.ne.s32.totalorder %s159, %s173
      %p175 = scmp.eq.s32.totalorder %s23, 0
      %p176 = por %p174, %p175
      %s177 = ssub.s32 %s17, %s24
      %p178 = scmp.eq.s32.totalorder %s177, 0
      %s180 = sadd.s32 %s179, 1
      %s181 = scalar_select %p178, %s179, %s180
      %p184 = pneg %p178
      %p185 = scmp.eq.s32.totalorder %s17, 2
      %p186 = por %p184, %p185
      %p187 = scmp.ne.s32.totalorder %s179, %s182
      %p188 = scmp.eq.s32.totalorder %s17, 0
      %p189 = por %p187, %p188
      %p190 = scmp.ne.s32.totalorder %s179, %s182
      %p191 = scmp.eq.s32.totalorder %s22, 2
      %p192 = por %p190, %p191
      %p193 = scmp.ne.s32.totalorder %s182, %s183
      %p194 = scmp.eq.s32.totalorder %s22, 0
      %p195 = por %p193, %p194
      %p196 = scmp.ne.s32.totalorder %s182, %s183
      %p197 = scmp.eq.s32.totalorder %s23, 2
      %p198 = por %p196, %p197
      %p200 = scmp.ne.s32.totalorder %s183, %s199
      %p201 = scmp.eq.s32.totalorder %s23, 0
      %p202 = por %p200, %p201
      %p203 = scmp.le.s32.totalorder 1, %s17
      %p204 = scmp.lt.s32.totalorder %s17, 4
      %p205 = pnand %p203, %p204
      %p206 = pneg %p205
      // Predicated region
      $region9: #{tpu_custom_call.1} parent=5 // pred_check
        _
      $region10: #{tpu_custom_call.1} parent=5 // pred_check_branch
        %208 = sbr.rel (%p205) target = $region12
      $region11: #{tpu_custom_call.1} parent=5 // pred_region
        %s209 = ssub.s32 %s17, 1
        // Predicated region
        $region13: #{tpu_custom_call.1} parent=11 // pred_check
          %p210 = pneg %p64
        $region14: #{tpu_custom_call.1} parent=11 // pred_check_branch
          %212 = sbr.rel (%p210) target = $region16
        $region15: #{tpu_custom_call.1} parent=11 // pred_region
          %s214 = ssub.s32 8192, 8192
          %215 = vsyncadd [#allocation5], %s214
          %s216 = sshll.u32 [#allocation4], 4
          %s217 = int_to_ptr.vmem [resolvable:$true] %s216
          %222 = dma.hbm_to_vmem [thread:$0]  %s1, 8192, %s217, [#allocation5], 64, 64, 4
        $region16: #{tpu_custom_call.1} parent=11 // pred_fallthru
          _
        // Predicated region
        $region17: #{tpu_custom_call.1} parent=11 // pred_check
          %p223 = pneg %p85
        $region18: #{tpu_custom_call.1} parent=11 // pred_check_branch
          %225 = sbr.rel (%p223) target = $region20
        $region19: #{tpu_custom_call.1} parent=11 // pred_region
          _
        $region20: #{tpu_custom_call.1} parent=11 // pred_fallthru
          _
        // Predicated region
        $region21: #{tpu_custom_call.1} parent=11 // pred_check
          %p226 = pneg %p106
        $region22: #{tpu_custom_call.1} parent=11 // pred_check_branch
          %228 = sbr.rel (%p226) target = $region24
        $region23: #{tpu_custom_call.1} parent=11 // pred_region
          _
        $region24: #{tpu_custom_call.1} parent=11 // pred_fallthru
          _
        // Predicated region
        $region25: #{tpu_custom_call.1} parent=11 // pred_check
          %p229 = pneg %p127
        $region26: #{tpu_custom_call.1} parent=11 // pred_check_branch
          %231 = sbr.rel (%p229) target = $region28
        $region27: #{tpu_custom_call.1} parent=11 // pred_region
          _
        $region28: #{tpu_custom_call.1} parent=11 // pred_fallthru
          _
        // Predicated region
        $region29: #{tpu_custom_call.1} parent=11 // pred_check
          %p232 = pneg %p148
        $region30: #{tpu_custom_call.1} parent=11 // pred_check_branch
          %234 = sbr.rel (%p232) target = $region32
        $region31: #{tpu_custom_call.1} parent=11 // pred_region
          _
        $region32: #{tpu_custom_call.1} parent=11 // pred_fallthru
          _
        // Predicated region
        $region33: #{tpu_custom_call.1} parent=11 // pred_check
          %p235 = pneg %p169
        $region34: #{tpu_custom_call.1} parent=11 // pred_check_branch
          %237 = sbr.rel (%p235) target = $region36
        $region35: #{tpu_custom_call.1} parent=11 // pred_region
          _
        $region36: #{tpu_custom_call.1} parent=11 // pred_fallthru
          _
      $region12: #{tpu_custom_call.1} parent=5 // pred_fallthru
        _
      %p238 = scmp.lt.s32.totalorder %s17, 3
      // Predicated region
      $region37: #{tpu_custom_call.1} parent=5 // pred_check
        %p239 = pneg %p238
      $region38: #{tpu_custom_call.1} parent=5 // pred_check_branch
        %241 = sbr.rel (%p239) target = $region40
      $region39: #{tpu_custom_call.1} parent=5 // pred_region
        // Predicated region
        $region41: #{tpu_custom_call.1} parent=39 // pred_check
          %p242 = pneg %p37
        $region42: #{tpu_custom_call.1} parent=39 // pred_check_branch
          %244 = sbr.rel (%p242) target = $region44
        $region43: #{tpu_custom_call.1} parent=39 // pred_region
          %s245 = sand.u32 %s27, 1
          %s246 = scalar_lea.sflag [#allocation3], %s245
          %s247 = sand.u32 %s27, 1
          %s248 = smul.addr %s247, 128
          %s249 = scalar_lea.vmem [#allocation2], %s248
          %s250 = smul.u32 2, %s17
          %s251 = ssub.s32 5, %s250
          %p252 = scmp.lt.s32.totalorder %s251, 2
          %s253 = scalar_select %p252, %s251, 2
          %s254 = smul.u32 128, %s253
          %s255 = smul.u32 %s254, 8
          %s257 = ssub.s32 2048, %s255
          %258 = vsyncadd %s246, %s257
          %p259 = scmp.ne.s32.totalorder 0, %s255
          %s260 = smul.addr %s250, 8
          %s261 = smul.addr %s260, 128
          %s262 = scalar_lea.hbm %s0, %s261
          %s263 = smul.u32 64, %s253
          %s264 = sshll.u32 %s249, 4
          %s265 = int_to_ptr.vmem [resolvable:$true] %s264
          %s266 = sshll.u32 %s263, 4
          %270 = dma.hbm_to_vmem [thread:$0]  (%p259), %s262, %s266, %s265, %s246, 1024, 1024, 64
        $region44: #{tpu_custom_call.1} parent=39 // pred_fallthru
          _
      $region40: #{tpu_custom_call.1} parent=5 // pred_fallthru
        _
      %p271 = scmp.le.s32.totalorder 1, %s17
      %p272 = scmp.lt.s32.totalorder %s17, 4
      %p273 = pnand %p271, %p272
      %p274 = pneg %p273
      // Predicated region
      $region45: #{tpu_custom_call.1} parent=5 // pred_check
        _
      $region46: #{tpu_custom_call.1} parent=5 // pred_check_branch
        %276 = sbr.rel (%p273) target = $region48
      $region47: #{tpu_custom_call.1} parent=5 // pred_region
        %s277 = ssub.s32 %s17, 1
        %s278 = sand.u32 %s30, 1
        %s279 = scalar_lea.sflag [#allocation3], %s278
        %s280 = sand.u32 %s30, 1
        %s281 = smul.addr %s280, 128
        %s282 = scalar_lea.vmem [#allocation2], %s281
        // Predicated region
        $region49: #{tpu_custom_call.1} parent=47 // pred_check
          %p283 = pneg %p43
        $region50: #{tpu_custom_call.1} parent=47 // pred_check_branch
          %285 = sbr.rel (%p283) target = $region52
        $region51: #{tpu_custom_call.1} parent=47 // pred_region
          %286 = dma.done %s279, 2048
        $region52: #{tpu_custom_call.1} parent=47 // pred_fallthru
          _
        // Predicated region
        $region53: #{tpu_custom_call.1} parent=47 // pred_check
          %p287 = pneg %p64
        $region54: #{tpu_custom_call.1} parent=47 // pred_check_branch
          %289 = sbr.rel (%p287) target = $region56
        $region55: #{tpu_custom_call.1} parent=47 // pred_region
          %290 = dma.done [#allocation5], 8192
        $region56: #{tpu_custom_call.1} parent=47 // pred_fallthru
          _
        %s291 = sand.u32 %s30, 1
        %s292 = scalar_lea.sflag [#allocation3], %s291
        %s293 = sand.u32 %s30, 1
        %s294 = smul.addr %s293, 128
        %s295 = scalar_lea.vmem [#allocation2], %s294
        %p296 = pneg %p43
        %p297 = pneg %p40
        %p298 = pneg %p64
        %p299 = pneg %p61
        %p300 = pneg %p85
        %p301 = pneg %p82
        %p302 = pneg %p106
        %p303 = pneg %p103
        %p304 = pneg %p127
        %p305 = pneg %p124
        %p306 = pneg %p148
        %p307 = pneg %p145
        %p308 = pneg %p169
        %p309 = pneg %p166
        %p310 = pneg %p195
        %p311 = pneg %p192
        %s312 = sand.u32 %s182, 1
        %s313 = sand.u32 %s182, 1
        %s314 = smul.addr %s313, 16
        %s315 = scalar_lea.vmem [#allocation6], %s314
        %s316 = smul.u32 2, %s22
        %s317 = ssub.s32 5, %s316
        %p318 = scmp.lt.s32.totalorder %s317, 2
        %s319 = scalar_select %p318, %s317, 2
        %s320 = smul.u32 128, %s319
        %s321 = smul.u32 %s320, 8
        %s322 = smul.u32 2, %s22
        %s323 = ssub.s32 5, %s322
        %p324 = scmp.lt.s32.totalorder %s323, 2
        %s325 = scalar_select %p324, %s323, 2
        %s326 = smul.u32 128, %s325
        %v328 = vld [vmem:[%s282] sm:$0xff]
        %v329 = vld [vmem:[%s282 + $0x8] sm:$0xff]
        %v330 = vld [vmem:[%s282 + $0x10] sm:$0xff]
        %v331 = vld [vmem:[%s282 + $0x18] sm:$0xff]
        %v332 = vld [vmem:[%s282 + $0x20] sm:$0xff]
        %v333 = vld [vmem:[%s282 + $0x28] sm:$0xff]
        %v334 = vld [vmem:[%s282 + $0x30] sm:$0xff]
        %v335 = vld [vmem:[%s282 + $0x38] sm:$0xff]
        %v336 = vld [vmem:[%s282 + $0x40] sm:$0xff]
        %v337 = vld [vmem:[%s282 + $0x48] sm:$0xff]
        %v338 = vld [vmem:[%s282 + $0x50] sm:$0xff]
        %v339 = vld [vmem:[%s282 + $0x58] sm:$0xff]
        %v340 = vld [vmem:[%s282 + $0x60] sm:$0xff]
        %v341 = vld [vmem:[%s282 + $0x68] sm:$0xff]
        %v342 = vld [vmem:[%s282 + $0x70] sm:$0xff]
        %v343 = vld [vmem:[%s282 + $0x78] sm:$0xff]
        %v344 = vpack.c.bf16 %v336, %v328
        %v345 = vpack.c.bf16 %v337, %v329
        %v346 = vpack.c.bf16 %v338, %v330
        %v347 = vpack.c.bf16 %v339, %v331
        %v348 = vpack.c.bf16 %v340, %v332
        %v349 = vpack.c.bf16 %v341, %v333
        %v350 = vpack.c.bf16 %v342, %v334
        %v351 = vpack.c.bf16 %v343, %v335
        %v352 = vld [vmem:[#allocation4] sm:$0xf]
        %v353 = vld [vmem:[#allocation4 + $0x4] sm:$0xf]
        %v354 = vld [vmem:[#allocation4 + $0x8] sm:$0xf]
        %v355 = vld [vmem:[#allocation4 + $0xc] sm:$0xf]
        %v356 = vld [vmem:[#allocation4 + $0x10] sm:$0xf]
        %v357 = vld [vmem:[#allocation4 + $0x14] sm:$0xf]
        %v358 = vld [vmem:[#allocation4 + $0x18] sm:$0xf]
        %v359 = vld [vmem:[#allocation4 + $0x1c] sm:$0xf]
        %v360 = vld [vmem:[#allocation4 + $0x20] sm:$0xf]
        %v361 = vld [vmem:[#allocation4 + $0x24] sm:$0xf]
        %v362 = vld [vmem:[#allocation4 + $0x28] sm:$0xf]
        %v363 = vld [vmem:[#allocation4 + $0x2c] sm:$0xf]
        %v364 = vld [vmem:[#allocation4 + $0x30] sm:$0xf]
        %v365 = vld [vmem:[#allocation4 + $0x34] sm:$0xf]
        %v366 = vld [vmem:[#allocation4 + $0x38] sm:$0xf]
        %v367 = vld [vmem:[#allocation4 + $0x3c] sm:$0xf]
        %v368 = vld [vmem:[#allocation4 + $0x40] sm:$0xf]
        %v369 = vld [vmem:[#allocation4 + $0x44] sm:$0xf]
        %v370 = vld [vmem:[#allocation4 + $0x48] sm:$0xf]
        %v371 = vld [vmem:[#allocation4 + $0x4c] sm:$0xf]
        %v372 = vld [vmem:[#allocation4 + $0x50] sm:$0xf]
        %v373 = vld [vmem:[#allocation4 + $0x54] sm:$0xf]
        %v374 = vld [vmem:[#allocation4 + $0x58] sm:$0xf]
        %v375 = vld [vmem:[#allocation4 + $0x5c] sm:$0xf]
        %v376 = vld [vmem:[#allocation4 + $0x60] sm:$0xf]
        %v377 = vld [vmem:[#allocation4 + $0x64] sm:$0xf]
        %v378 = vld [vmem:[#allocation4 + $0x68] sm:$0xf]
        %v379 = vld [vmem:[#allocation4 + $0x6c] sm:$0xf]
        %v380 = vld [vmem:[#allocation4 + $0x70] sm:$0xf]
        %v381 = vld [vmem:[#allocation4 + $0x74] sm:$0xf]
        %v382 = vld [vmem:[#allocation4 + $0x78] sm:$0xf]
        %v383 = vld [vmem:[#allocation4 + $0x7c] sm:$0xf]
        %v384 = vld [vmem:[#allocation4 + $0x80] sm:$0xf]
        %v385 = vld [vmem:[#allocation4 + $0x84] sm:$0xf]
        %v386 = vld [vmem:[#allocation4 + $0x88] sm:$0xf]
        %v387 = vld [vmem:[#allocation4 + $0x8c] sm:$0xf]
        %v388 = vld [vmem:[#allocation4 + $0x90] sm:$0xf]
        %v389 = vld [vmem:[#allocation4 + $0x94] sm:$0xf]
        %v390 = vld [vmem:[#allocation4 + $0x98] sm:$0xf]
        %v391 = vld [vmem:[#allocation4 + $0x9c] sm:$0xf]
        %v392 = vld [vmem:[#allocation4 + $0xa0] sm:$0xf]
        %v393 = vld [vmem:[#allocation4 + $0xa4] sm:$0xf]
        %v394 = vld [vmem:[#allocation4 + $0xa8] sm:$0xf]
        %v395 = vld [vmem:[#allocation4 + $0xac] sm:$0xf]
        %v396 = vld [vmem:[#allocation4 + $0xb0] sm:$0xf]
        %v397 = vld [vmem:[#allocation4 + $0xb4] sm:$0xf]
        %v398 = vld [vmem:[#allocation4 + $0xb8] sm:$0xf]
        %v399 = vld [vmem:[#allocation4 + $0xbc] sm:$0xf]
        %v400 = vld [vmem:[#allocation4 + $0xc0] sm:$0xf]
        %v401 = vld [vmem:[#allocation4 + $0xc4] sm:$0xf]
        %v402 = vld [vmem:[#allocation4 + $0xc8] sm:$0xf]
        %v403 = vld [vmem:[#allocation4 + $0xcc] sm:$0xf]
        %v404 = vld [vmem:[#allocation4 + $0xd0] sm:$0xf]
        %v405 = vld [vmem:[#allocation4 + $0xd4] sm:$0xf]
        %v406 = vld [vmem:[#allocation4 + $0xd8] sm:$0xf]
        %v407 = vld [vmem:[#allocation4 + $0xdc] sm:$0xf]
        %v408 = vld [vmem:[#allocation4 + $0xe0] sm:$0xf]
        %v409 = vld [vmem:[#allocation4 + $0xe4] sm:$0xf]
        %v410 = vld [vmem:[#allocation4 + $0xe8] sm:$0xf]
        %v411 = vld [vmem:[#allocation4 + $0xec] sm:$0xf]
        %v412 = vld [vmem:[#allocation4 + $0xf0] sm:$0xf]
        %v413 = vld [vmem:[#allocation4 + $0xf4] sm:$0xf]
        %v414 = vld [vmem:[#allocation4 + $0xf8] sm:$0xf]
        %v415 = vld [vmem:[#allocation4 + $0xfc] sm:$0xf]
        %v416 = vld [vmem:[#allocation4 + $0x100] sm:$0xf]
        %v417 = vld [vmem:[#allocation4 + $0x104] sm:$0xf]
        %v418 = vld [vmem:[#allocation4 + $0x108] sm:$0xf]
        %v419 = vld [vmem:[#allocation4 + $0x10c] sm:$0xf]
        %v420 = vld [vmem:[#allocation4 + $0x110] sm:$0xf]
        %v421 = vld [vmem:[#allocation4 + $0x114] sm:$0xf]
        %v422 = vld [vmem:[#allocation4 + $0x118] sm:$0xf]
        %v423 = vld [vmem:[#allocation4 + $0x11c] sm:$0xf]
        %v424 = vld [vmem:[#allocation4 + $0x120] sm:$0xf]
        %v425 = vld [vmem:[#allocation4 + $0x124] sm:$0xf]
        %v426 = vld [vmem:[#allocation4 + $0x128] sm:$0xf]
        %v427 = vld [vmem:[#allocation4 + $0x12c] sm:$0xf]
        %v428 = vld [vmem:[#allocation4 + $0x130] sm:$0xf]
        %v429 = vld [vmem:[#allocation4 + $0x134] sm:$0xf]
        %v430 = vld [vmem:[#allocation4 + $0x138] sm:$0xf]
        %v431 = vld [vmem:[#allocation4 + $0x13c] sm:$0xf]
        %v432 = vld [vmem:[#allocation4 + $0x140] sm:$0xf]
        %v433 = vld [vmem:[#allocation4 + $0x144] sm:$0xf]
        %v434 = vld [vmem:[#allocation4 + $0x148] sm:$0xf]
        %v435 = vld [vmem:[#allocation4 + $0x14c] sm:$0xf]
        %v436 = vld [vmem:[#allocation4 + $0x150] sm:$0xf]
        %v437 = vld [vmem:[#allocation4 + $0x154] sm:$0xf]
        %v438 = vld [vmem:[#allocation4 + $0x158] sm:$0xf]
        %v439 = vld [vmem:[#allocation4 + $0x15c] sm:$0xf]
        %v440 = vld [vmem:[#allocation4 + $0x160] sm:$0xf]
        %v441 = vld [vmem:[#allocation4 + $0x164] sm:$0xf]
        %v442 = vld [vmem:[#allocation4 + $0x168] sm:$0xf]
        %v443 = vld [vmem:[#allocation4 + $0x16c] sm:$0xf]
        %v444 = vld [vmem:[#allocation4 + $0x170] sm:$0xf]
        %v445 = vld [vmem:[#allocation4 + $0x174] sm:$0xf]
        %v446 = vld [vmem:[#allocation4 + $0x178] sm:$0xf]
        %v447 = vld [vmem:[#allocation4 + $0x17c] sm:$0xf]
        %v448 = vld [vmem:[#allocation4 + $0x180] sm:$0xf]
        %v449 = vld [vmem:[#allocation4 + $0x184] sm:$0xf]
        %v450 = vld [vmem:[#allocation4 + $0x188] sm:$0xf]
        %v451 = vld [vmem:[#allocation4 + $0x18c] sm:$0xf]
        %v452 = vld [vmem:[#allocation4 + $0x190] sm:$0xf]
        %v453 = vld [vmem:[#allocation4 + $0x194] sm:$0xf]
        %v454 = vld [vmem:[#allocation4 + $0x198] sm:$0xf]
        %v455 = vld [vmem:[#allocation4 + $0x19c] sm:$0xf]
        %v456 = vld [vmem:[#allocation4 + $0x1a0] sm:$0xf]
        %v457 = vld [vmem:[#allocation4 + $0x1a4] sm:$0xf]
        %v458 = vld [vmem:[#allocation4 + $0x1a8] sm:$0xf]
        %v459 = vld [vmem:[#allocation4 + $0x1ac] sm:$0xf]
        %v460 = vld [vmem:[#allocation4 + $0x1b0] sm:$0xf]
        %v461 = vld [vmem:[#allocation4 + $0x1b4] sm:$0xf]
        %v462 = vld [vmem:[#allocation4 + $0x1b8] sm:$0xf]
        %v463 = vld [vmem:[#allocation4 + $0x1bc] sm:$0xf]
        %v464 = vld [vmem:[#allocation4 + $0x1c0] sm:$0xf]
        %v465 = vld [vmem:[#allocation4 + $0x1c4] sm:$0xf]
        %v466 = vld [vmem:[#allocation4 + $0x1c8] sm:$0xf]
        %v467 = vld [vmem:[#allocation4 + $0x1cc] sm:$0xf]
        %v468 = vld [vmem:[#allocation4 + $0x1d0] sm:$0xf]
        %v469 = vld [vmem:[#allocation4 + $0x1d4] sm:$0xf]
        %v470 = vld [vmem:[#allocation4 + $0x1d8] sm:$0xf]
        %v471 = vld [vmem:[#allocation4 + $0x1dc] sm:$0xf]
        %v472 = vld [vmem:[#allocation4 + $0x1e0] sm:$0xf]
        %v473 = vld [vmem:[#allocation4 + $0x1e4] sm:$0xf]
        %v474 = vld [vmem:[#allocation4 + $0x1e8] sm:$0xf]
        %v475 = vld [vmem:[#allocation4 + $0x1ec] sm:$0xf]
        %v476 = vld [vmem:[#allocation4 + $0x1f0] sm:$0xf]
        %v477 = vld [vmem:[#allocation4 + $0x1f4] sm:$0xf]
        %v478 = vld [vmem:[#allocation4 + $0x1f8] sm:$0xf]
        %v479 = vld [vmem:[#allocation4 + $0x1fc] sm:$0xf]
        %v480 = vld [vmem:[%s2] sm:$0x1]
        %v482 = vlaneseq
        %v483 = vshrl.u32 %v482, 7
        %v484 = vsub.s32 0, %v483
        %v485 = vrot.slane %v480, %v484
        %v615 = vunpack.c.l.b16 %v352
        %v616 = vunpack.c.l.b16 %v353
        %v617 = vunpack.c.l.b16 %v354
        %v618 = vunpack.c.l.b16 %v355
        %v619 = vunpack.c.l.b16 %v356
        %v620 = vunpack.c.l.b16 %v357
        %v621 = vunpack.c.l.b16 %v358
        %v622 = vunpack.c.l.b16 %v359
        %v623 = vunpack.c.l.b16 %v360
        %v624 = vunpack.c.l.b16 %v361
        %v625 = vunpack.c.l.b16 %v362
        %v626 = vunpack.c.l.b16 %v363
        %v627 = vunpack.c.l.b16 %v364
        %v628 = vunpack.c.l.b16 %v365
        %v629 = vunpack.c.l.b16 %v366
        %v630 = vunpack.c.l.b16 %v367
        %v631 = vunpack.c.l.b16 %v368
        %v632 = vunpack.c.l.b16 %v369
        %v633 = vunpack.c.l.b16 %v370
        %v634 = vunpack.c.l.b16 %v371
        %v635 = vunpack.c.l.b16 %v372
        %v636 = vunpack.c.l.b16 %v373
        %v637 = vunpack.c.l.b16 %v374
        %v638 = vunpack.c.l.b16 %v375
        %v639 = vunpack.c.l.b16 %v376
        %v640 = vunpack.c.l.b16 %v377
        %v641 = vunpack.c.l.b16 %v378
        %v642 = vunpack.c.l.b16 %v379
        %v643 = vunpack.c.l.b16 %v380
        %v644 = vunpack.c.l.b16 %v381
        %v645 = vunpack.c.l.b16 %v382
        %v646 = vunpack.c.l.b16 %v383
        %v647 = vunpack.c.l.b16 %v384
        %v648 = vunpack.c.l.b16 %v385
        %v649 = vunpack.c.l.b16 %v386
        %v650 = vunpack.c.l.b16 %v387
        %v651 = vunpack.c.l.b16 %v388
        %v652 = vunpack.c.l.b16 %v389
        %v653 = vunpack.c.l.b16 %v390
        %v654 = vunpack.c.l.b16 %v391
        %v655 = vunpack.c.l.b16 %v392
        %v656 = vunpack.c.l.b16 %v393
        %v657 = vunpack.c.l.b16 %v394
        %v658 = vunpack.c.l.b16 %v395
        %v659 = vunpack.c.l.b16 %v396
        %v660 = vunpack.c.l.b16 %v397
        %v661 = vunpack.c.l.b16 %v398
        %v662 = vunpack.c.l.b16 %v399
        %v663 = vunpack.c.l.b16 %v400
        %v664 = vunpack.c.l.b16 %v401
        %v665 = vunpack.c.l.b16 %v402
        %v666 = vunpack.c.l.b16 %v403
        %v667 = vunpack.c.l.b16 %v404
        %v668 = vunpack.c.l.b16 %v405
        %v669 = vunpack.c.l.b16 %v406
        %v670 = vunpack.c.l.b16 %v407
        %v671 = vunpack.c.l.b16 %v408
        %v672 = vunpack.c.l.b16 %v409
        %v673 = vunpack.c.l.b16 %v410
        %v674 = vunpack.c.l.b16 %v411
        %v675 = vunpack.c.l.b16 %v412
        %v676 = vunpack.c.l.b16 %v413
        %v677 = vunpack.c.l.b16 %v414
        %v678 = vunpack.c.l.b16 %v415
        %v679 = vunpack.c.l.b16 %v416
        %v680 = vunpack.c.l.b16 %v417
        %v681 = vunpack.c.l.b16 %v418
        %v682 = vunpack.c.l.b16 %v419
        %v683 = vunpack.c.l.b16 %v420
        %v684 = vunpack.c.l.b16 %v421
        %v685 = vunpack.c.l.b16 %v422
        %v686 = vunpack.c.l.b16 %v423
        %v687 = vunpack.c.l.b16 %v424
        %v688 = vunpack.c.l.b16 %v425
        %v689 = vunpack.c.l.b16 %v426
        %v690 = vunpack.c.l.b16 %v427
        %v691 = vunpack.c.l.b16 %v428
        %v692 = vunpack.c.l.b16 %v429
        %v693 = vunpack.c.l.b16 %v430
        %v694 = vunpack.c.l.b16 %v431
        %v695 = vunpack.c.l.b16 %v432
        %v696 = vunpack.c.l.b16 %v433
        %v697 = vunpack.c.l.b16 %v434
        %v698 = vunpack.c.l.b16 %v435
        %v699 = vunpack.c.l.b16 %v436
        %v700 = vunpack.c.l.b16 %v437
        %v701 = vunpack.c.l.b16 %v438
        %v702 = vunpack.c.l.b16 %v439
        %v703 = vunpack.c.l.b16 %v440
        %v704 = vunpack.c.l.b16 %v441
        %v705 = vunpack.c.l.b16 %v442
        %v706 = vunpack.c.l.b16 %v443
        %v707 = vunpack.c.l.b16 %v444
        %v708 = vunpack.c.l.b16 %v445
        %v709 = vunpack.c.l.b16 %v446
        %v710 = vunpack.c.l.b16 %v447
        %v711 = vunpack.c.l.b16 %v448
        %v712 = vunpack.c.l.b16 %v449
        %v713 = vunpack.c.l.b16 %v450
        %v714 = vunpack.c.l.b16 %v451
        %v715 = vunpack.c.l.b16 %v452
        %v716 = vunpack.c.l.b16 %v453
        %v717 = vunpack.c.l.b16 %v454
        %v718 = vunpack.c.l.b16 %v455
        %v719 = vunpack.c.l.b16 %v456
        %v720 = vunpack.c.l.b16 %v457
        %v721 = vunpack.c.l.b16 %v458
        %v722 = vunpack.c.l.b16 %v459
        %v723 = vunpack.c.l.b16 %v460
        %v724 = vunpack.c.l.b16 %v461
        %v725 = vunpack.c.l.b16 %v462
        %v726 = vunpack.c.l.b16 %v463
        %v727 = vunpack.c.l.b16 %v464
        %v728 = vunpack.c.l.b16 %v465
        %v729 = vunpack.c.l.b16 %v466
        %v730 = vunpack.c.l.b16 %v467
        %v731 = vunpack.c.l.b16 %v468
        %v732 = vunpack.c.l.b16 %v469
        %v733 = vunpack.c.l.b16 %v470
        %v734 = vunpack.c.l.b16 %v471
        %v735 = vunpack.c.l.b16 %v472
        %v736 = vunpack.c.l.b16 %v473
        %v737 = vunpack.c.l.b16 %v474
        %v738 = vunpack.c.l.b16 %v475
        %v739 = vunpack.c.l.b16 %v476
        %v740 = vunpack.c.l.b16 %v477
        %v741 = vunpack.c.l.b16 %v478
        %v742 = vunpack.c.l.b16 %v479
        %v743 = vpack.c.b16 %v616, %v615
        %v744 = vpack.c.b16 %v618, %v617
        %v745 = vpack.c.b16 %v620, %v619
        %v746 = vpack.c.b16 %v622, %v621
        %v747 = vpack.c.b16 %v624, %v623
        %v748 = vpack.c.b16 %v626, %v625
        %v749 = vpack.c.b16 %v628, %v627
        %v750 = vpack.c.b16 %v630, %v629
        %v751 = vpack.c.b16 %v632, %v631
        %v752 = vpack.c.b16 %v634, %v633
        %v753 = vpack.c.b16 %v636, %v635
        %v754 = vpack.c.b16 %v638, %v637
        %v755 = vpack.c.b16 %v640, %v639
        %v756 = vpack.c.b16 %v642, %v641
        %v757 = vpack.c.b16 %v644, %v643
        %v758 = vpack.c.b16 %v646, %v645
        %v759 = vpack.c.b16 %v648, %v647
        %v760 = vpack.c.b16 %v650, %v649
        %v761 = vpack.c.b16 %v652, %v651
        %v762 = vpack.c.b16 %v654, %v653
        %v763 = vpack.c.b16 %v656, %v655
        %v764 = vpack.c.b16 %v658, %v657
        %v765 = vpack.c.b16 %v660, %v659
        %v766 = vpack.c.b16 %v662, %v661
        %v767 = vpack.c.b16 %v664, %v663
        %v768 = vpack.c.b16 %v666, %v665
        %v769 = vpack.c.b16 %v668, %v667
        %v770 = vpack.c.b16 %v670, %v669
        %v771 = vpack.c.b16 %v672, %v671
        %v772 = vpack.c.b16 %v674, %v673
        %v773 = vpack.c.b16 %v676, %v675
        %v774 = vpack.c.b16 %v678, %v677
        %v775 = vpack.c.b16 %v680, %v679
        %v776 = vpack.c.b16 %v682, %v681
        %v777 = vpack.c.b16 %v684, %v683
        %v778 = vpack.c.b16 %v686, %v685
        %v779 = vpack.c.b16 %v688, %v687
        %v780 = vpack.c.b16 %v690, %v689
        %v781 = vpack.c.b16 %v692, %v691
        %v782 = vpack.c.b16 %v694, %v693
        %v783 = vpack.c.b16 %v696, %v695
        %v784 = vpack.c.b16 %v698, %v697
        %v785 = vpack.c.b16 %v700, %v699
        %v786 = vpack.c.b16 %v702, %v701
        %v787 = vpack.c.b16 %v704, %v703
        %v788 = vpack.c.b16 %v706, %v705
        %v789 = vpack.c.b16 %v708, %v707
        %v790 = vpack.c.b16 %v710, %v709
        %v791 = vpack.c.b16 %v712, %v711
        %v792 = vpack.c.b16 %v714, %v713
        %v793 = vpack.c.b16 %v716, %v715
        %v794 = vpack.c.b16 %v718, %v717
        %v795 = vpack.c.b16 %v720, %v719
        %v796 = vpack.c.b16 %v722, %v721
        %v797 = vpack.c.b16 %v724, %v723
        %v798 = vpack.c.b16 %v726, %v725
        %v799 = vpack.c.b16 %v728, %v727
        %v800 = vpack.c.b16 %v730, %v729
        %v801 = vpack.c.b16 %v732, %v731
        %v802 = vpack.c.b16 %v734, %v733
        %v803 = vpack.c.b16 %v736, %v735
        %v804 = vpack.c.b16 %v738, %v737
        %v805 = vpack.c.b16 %v740, %v739
        %v806 = vpack.c.b16 %v742, %v741
        %871 = vmatprep.subr.bf16.mxu0 0
        %872 = vmatpush1.bf16.msra.mxu0 %v743
        %873 = vmatprep.subr.bf16.mxu0 0
        %874 = vmatpush1.bf16.msra.mxu0 %v744
        %875 = vmatprep.subr.bf16.mxu0 0
        %876 = vmatpush1.bf16.msra.mxu0 %v745
        %877 = vmatprep.subr.bf16.mxu0 0
        %878 = vmatpush1.bf16.msra.mxu0 %v746
        %879 = vmatprep.subr.bf16.mxu0 0
        %880 = vmatpush1.bf16.msra.mxu0 %v747
        %881 = vmatprep.subr.bf16.mxu0 0
        %882 = vmatpush1.bf16.msra.mxu0 %v748
        %883 = vmatprep.subr.bf16.mxu0 0
        %884 = vmatpush1.bf16.msra.mxu0 %v749
        %885 = vmatprep.subr.bf16.mxu0 0
        %886 = vmatpush1.bf16.msra.mxu0 %v750
        %887 = vmatprep.subr.bf16.mxu0 0
        %888 = vmatpush1.bf16.msra.mxu0 %v751
        %889 = vmatprep.subr.bf16.mxu0 0
        %890 = vmatpush1.bf16.msra.mxu0 %v752
        %891 = vmatprep.subr.bf16.mxu0 0
        %892 = vmatpush1.bf16.msra.mxu0 %v753
        %893 = vmatprep.subr.bf16.mxu0 0
        %894 = vmatpush1.bf16.msra.mxu0 %v754
        %895 = vmatprep.subr.bf16.mxu0 0
        %896 = vmatpush1.bf16.msra.mxu0 %v755
        %897 = vmatprep.subr.bf16.mxu0 0
        %898 = vmatpush1.bf16.msra.mxu0 %v756
        %899 = vmatprep.subr.bf16.mxu0 0
        %900 = vmatpush1.bf16.msra.mxu0 %v757
        %901 = vmatprep.subr.bf16.mxu0 0
        %902 = vmatpush1.bf16.msra.mxu0 %v758
        %903 = vmatprep.mubr.bf16.mxu0 %v345
        %904 = vmatmul.mubr.bf16.gmra.mrb[0].mxu0 %v344
        %v905 = vpop.f32.mrb[0].mxu0
        %v906 = vadd.f32 %v485, %v905
        %v907 = vpop.f32.mrb[0].mxu0
        %v908 = vpop.f32.mrb[0].mxu0
        %v909 = vadd.f32 %v485, %v908
        %v910 = vpop.f32.mrb[0].mxu0
        %911 = vdwg.mxu0
        %912 = vmatprep.subr.bf16.mxu0 0
        %913 = vmatpush1.bf16.msra.mxu0 %v759
        %914 = vmatprep.subr.bf16.mxu0 0
        %915 = vmatpush1.bf16.msra.mxu0 %v760
        %916 = vmatprep.subr.bf16.mxu0 0
        %917 = vmatpush1.bf16.msra.mxu0 %v761
        %918 = vmatprep.subr.bf16.mxu0 0
        %919 = vmatpush1.bf16.msra.mxu0 %v762
        %920 = vmatprep.subr.bf16.mxu0 0
        %921 = vmatpush1.bf16.msra.mxu0 %v763
        %922 = vmatprep.subr.bf16.mxu0 0
        %923 = vmatpush1.bf16.msra.mxu0 %v764
        %924 = vmatprep.subr.bf16.mxu0 0
        %925 = vmatpush1.bf16.msra.mxu0 %v765
        %926 = vmatprep.subr.bf16.mxu0 0
        %927 = vmatpush1.bf16.msra.mxu0 %v766
        %928 = vmatprep.subr.bf16.mxu0 0
        %929 = vmatpush1.bf16.msra.mxu0 %v767
        %930 = vmatprep.subr.bf16.mxu0 0
        %931 = vmatpush1.bf16.msra.mxu0 %v768
        %932 = vmatprep.subr.bf16.mxu0 0
        %933 = vmatpush1.bf16.msra.mxu0 %v769
        %934 = vmatprep.subr.bf16.mxu0 0
        %935 = vmatpush1.bf16.msra.mxu0 %v770
        %936 = vmatprep.subr.bf16.mxu0 0
        %937 = vmatpush1.bf16.msra.mxu0 %v771
        %938 = vmatprep.subr.bf16.mxu0 0
        %939 = vmatpush1.bf16.msra.mxu0 %v772
        %940 = vmatprep.subr.bf16.mxu0 0
        %941 = vmatpush1.bf16.msra.mxu0 %v773
        %942 = vmatprep.subr.bf16.mxu0 0
        %943 = vmatpush1.bf16.msra.mxu0 %v774
        %944 = vmatprep.mubr.bf16.mxu0 %v347
        %945 = vmatmul.mubr.bf16.gmra.mrb[0].mxu0 %v346
        %v946 = vpop.f32.mrb[0].mxu0
        %v947 = vadd.f32 %v906, %v946
        %v948 = vpop.f32.mrb[0].mxu0
        %v949 = vpop.f32.mrb[0].mxu0
        %v950 = vadd.f32 %v909, %v949
        %v951 = vpop.f32.mrb[0].mxu0
        %952 = vdwg.mxu0
        %953 = vmatprep.subr.bf16.mxu0 0
        %954 = vmatpush1.bf16.msra.mxu0 %v775
        %955 = vmatprep.subr.bf16.mxu0 0
        %956 = vmatpush1.bf16.msra.mxu0 %v776
        %957 = vmatprep.subr.bf16.mxu0 0
        %958 = vmatpush1.bf16.msra.mxu0 %v777
        %959 = vmatprep.subr.bf16.mxu0 0
        %960 = vmatpush1.bf16.msra.mxu0 %v778
        %961 = vmatprep.subr.bf16.mxu0 0
        %962 = vmatpush1.bf16.msra.mxu0 %v779
        %963 = vmatprep.subr.bf16.mxu0 0
        %964 = vmatpush1.bf16.msra.mxu0 %v780
        %965 = vmatprep.subr.bf16.mxu0 0
        %966 = vmatpush1.bf16.msra.mxu0 %v781
        %967 = vmatprep.subr.bf16.mxu0 0
        %968 = vmatpush1.bf16.msra.mxu0 %v782
        %969 = vmatprep.subr.bf16.mxu0 0
        %970 = vmatpush1.bf16.msra.mxu0 %v783
        %971 = vmatprep.subr.bf16.mxu0 0
        %972 = vmatpush1.bf16.msra.mxu0 %v784
        %973 = vmatprep.subr.bf16.mxu0 0
        %974 = vmatpush1.bf16.msra.mxu0 %v785
        %975 = vmatprep.subr.bf16.mxu0 0
        %976 = vmatpush1.bf16.msra.mxu0 %v786
        %977 = vmatprep.subr.bf16.mxu0 0
        %978 = vmatpush1.bf16.msra.mxu0 %v787
        %979 = vmatprep.subr.bf16.mxu0 0
        %980 = vmatpush1.bf16.msra.mxu0 %v788
        %981 = vmatprep.subr.bf16.mxu0 0
        %982 = vmatpush1.bf16.msra.mxu0 %v789
        %983 = vmatprep.subr.bf16.mxu0 0
        %984 = vmatpush1.bf16.msra.mxu0 %v790
        %985 = vmatprep.mubr.bf16.mxu0 %v349
        %986 = vmatmul.mubr.bf16.gmra.mrb[0].mxu0 %v348
        %v987 = vpop.f32.mrb[0].mxu0
        %v988 = vadd.f32 %v947, %v987
        %v989 = vpop.f32.mrb[0].mxu0
        %v990 = vpop.f32.mrb[0].mxu0
        %v991 = vadd.f32 %v950, %v990
        %v992 = vpop.f32.mrb[0].mxu0
        %993 = vdwg.mxu0
        %994 = vmatprep.subr.bf16.mxu0 0
        %995 = vmatpush1.bf16.msra.mxu0 %v791
        %996 = vmatprep.subr.bf16.mxu0 0
        %997 = vmatpush1.bf16.msra.mxu0 %v792
        %998 = vmatprep.subr.bf16.mxu0 0
        %999 = vmatpush1.bf16.msra.mxu0 %v793
        %1000 = vmatprep.subr.bf16.mxu0 0
        %1001 = vmatpush1.bf16.msra.mxu0 %v794
        %1002 = vmatprep.subr.bf16.mxu0 0
        %1003 = vmatpush1.bf16.msra.mxu0 %v795
        %1004 = vmatprep.subr.bf16.mxu0 0
        %1005 = vmatpush1.bf16.msra.mxu0 %v796
        %1006 = vmatprep.subr.bf16.mxu0 0
        %1007 = vmatpush1.bf16.msra.mxu0 %v797
        %1008 = vmatprep.subr.bf16.mxu0 0
        %1009 = vmatpush1.bf16.msra.mxu0 %v798
        %1010 = vmatprep.subr.bf16.mxu0 0
        %1011 = vmatpush1.bf16.msra.mxu0 %v799
        %1012 = vmatprep.subr.bf16.mxu0 0
        %1013 = vmatpush1.bf16.msra.mxu0 %v800
        %1014 = vmatprep.subr.bf16.mxu0 0
        %1015 = vmatpush1.bf16.msra.mxu0 %v801
        %1016 = vmatprep.subr.bf16.mxu0 0
        %1017 = vmatpush1.bf16.msra.mxu0 %v802
        %1018 = vmatprep.subr.bf16.mxu0 0
        %1019 = vmatpush1.bf16.msra.mxu0 %v803
        %1020 = vmatprep.subr.bf16.mxu0 0
        %1021 = vmatpush1.bf16.msra.mxu0 %v804
        %1022 = vmatprep.subr.bf16.mxu0 0
        %1023 = vmatpush1.bf16.msra.mxu0 %v805
        %1024 = vmatprep.subr.bf16.mxu0 0
        %1025 = vmatpush1.bf16.msra.mxu0 %v806
        %1026 = vmatprep.mubr.bf16.mxu0 %v351
        %1027 = vmatmul.mubr.bf16.gmra.mrb[0].mxu0 %v350
        %v1028 = vpop.f32.mrb[0].mxu0
        %v1029 = vadd.f32 %v988, %v1028
        %v1030 = vpop.f32.mrb[0].mxu0
        %v1031 = vpop.f32.mrb[0].mxu0
        %v1032 = vadd.f32 %v991, %v1031
        %v1033 = vpop.f32.mrb[0].mxu0
        %1034 = vdwg.mxu0
        %v1035 = vmax.f32 %v1029, 0.0
        %v1036 = vmax.f32 %v1032, 0.0
        %v1037 = vpack.c.bf16 %v1036, %v1035
        %v1038 = vld [vmem:[%s3] sm:$0xf]
        %v1039 = vld [vmem:[%s3 + $0x4] sm:$0xf]
        %v1040 = vld [vmem:[%s3 + $0x8] sm:$0xf]
        %v1041 = vld [vmem:[%s3 + $0xc] sm:$0xf]
        %v1042 = vld [vmem:[%s3 + $0x10] sm:$0xf]
        %v1043 = vld [vmem:[%s3 + $0x14] sm:$0xf]
        %v1044 = vld [vmem:[%s3 + $0x18] sm:$0xf]
        %v1045 = vld [vmem:[%s3 + $0x1c] sm:$0xf]
        %v1046 = vld [vmem:[%s3 + $0x20] sm:$0xf]
        %v1047 = vld [vmem:[%s3 + $0x24] sm:$0xf]
        %v1048 = vld [vmem:[%s3 + $0x28] sm:$0xf]
        %v1049 = vld [vmem:[%s3 + $0x2c] sm:$0xf]
        %v1050 = vld [vmem:[%s3 + $0x30] sm:$0xf]
        %v1051 = vld [vmem:[%s3 + $0x34] sm:$0xf]
        %v1052 = vld [vmem:[%s3 + $0x38] sm:$0xf]
        %v1053 = vld [vmem:[%s3 + $0x3c] sm:$0xf]
        %v1054 = vld [vmem:[%s4] sm:$0x1]
        %v1056 = vlaneseq
        %v1057 = vshrl.u32 %v1056, 7
        %v1058 = vsub.s32 0, %v1057
        %v1059 = vrot.slane %v1054, %v1058
        %v1077 = vunpack.c.l.b16 %v1038
        %v1078 = vunpack.c.l.b16 %v1039
        %v1079 = vunpack.c.l.b16 %v1040
        %v1080 = vunpack.c.l.b16 %v1041
        %v1081 = vunpack.c.l.b16 %v1042
        %v1082 = vunpack.c.l.b16 %v1043
        %v1083 = vunpack.c.l.b16 %v1044
        %v1084 = vunpack.c.l.b16 %v1045
        %v1085 = vunpack.c.l.b16 %v1046
        %v1086 = vunpack.c.l.b16 %v1047
        %v1087 = vunpack.c.l.b16 %v1048
        %v1088 = vunpack.c.l.b16 %v1049
        %v1089 = vunpack.c.l.b16 %v1050
        %v1090 = vunpack.c.l.b16 %v1051
        %v1091 = vunpack.c.l.b16 %v1052
        %v1092 = vunpack.c.l.b16 %v1053
        %v1093 = vpack.c.b16 %v1078, %v1077
        %v1094 = vpack.c.b16 %v1080, %v1079
        %v1095 = vpack.c.b16 %v1082, %v1081
        %v1096 = vpack.c.b16 %v1084, %v1083
        %v1097 = vpack.c.b16 %v1086, %v1085
        %v1098 = vpack.c.b16 %v1088, %v1087
        %v1099 = vpack.c.b16 %v1090, %v1089
        %v1100 = vpack.c.b16 %v1092, %v1091
        %1109 = vmatprep.subr.bf16.mxu0 0
        %1110 = vmatpush1.bf16.msra.mxu0 %v1093
        %1111 = vmatprep.subr.bf16.mxu0 0
        %1112 = vmatpush1.bf16.msra.mxu0 %v1094
        %1113 = vmatprep.subr.bf16.mxu0 0
        %1114 = vmatpush1.bf16.msra.mxu0 %v1095
        %1115 = vmatprep.subr.bf16.mxu0 0
        %1116 = vmatpush1.bf16.msra.mxu0 %v1096
        %1117 = vmatprep.subr.bf16.mxu0 0
        %1118 = vmatpush1.bf16.msra.mxu0 %v1097
        %1119 = vmatprep.subr.bf16.mxu0 0
        %1120 = vmatpush1.bf16.msra.mxu0 %v1098
        %1121 = vmatprep.subr.bf16.mxu0 0
        %1122 = vmatpush1.bf16.msra.mxu0 %v1099
        %1123 = vmatprep.subr.bf16.mxu0 0
        %1124 = vmatpush1.bf16.msra.mxu0 %v1100
        %1125 = vmatprep.subr.bf16.mxu0 0
        %1126 = vmatpush1.bf16.msra.mxu0 0
        %1127 = vmatprep.subr.bf16.mxu0 0
        %1128 = vmatpush1.bf16.msra.mxu0 0
        %1129 = vmatprep.subr.bf16.mxu0 0
        %1130 = vmatpush1.bf16.msra.mxu0 0
        %1131 = vmatprep.subr.bf16.mxu0 0
        %1132 = vmatpush1.bf16.msra.mxu0 0
        %1133 = vmatprep.subr.bf16.mxu0 0
        %1134 = vmatpush1.bf16.msra.mxu0 0
        %1135 = vmatprep.subr.bf16.mxu0 0
        %1136 = vmatpush1.bf16.msra.mxu0 0
        %1137 = vmatprep.subr.bf16.mxu0 0
        %1138 = vmatpush1.bf16.msra.mxu0 0
        %1139 = vmatprep.subr.bf16.mxu0 0
        %1140 = vmatpush1.bf16.msra.mxu0 0
        %1141 = vmatprep.mubr.bf16.mxu0 0
        %1142 = vmatmul.mubr.bf16.gmra.mrb[0].mxu0 %v1037
        %v1143 = vpop.f32.mrb[0].mxu0
        %v1144 = vadd.f32 %v1059, %v1143
        %v1145 = vpop.f32.mrb[0].mxu0
        %v1146 = vpop.f32.mrb[0].mxu0
        %v1147 = vadd.f32 %v1059, %v1146
        %v1148 = vpop.f32.mrb[0].mxu0
        %1149 = vdwg.mxu0
        %v1150 = vmax.f32 %v1144, 0.0
        %v1151 = vmax.f32 %v1147, 0.0
        %v1152 = vpack.c.bf16 %v1151, %v1150
        %v1153 = vld [vmem:[%s5] sm:$0xf]
        %v1154 = vld [vmem:[%s5 + $0x4] sm:$0xf]
        %v1155 = vld [vmem:[%s5 + $0x8] sm:$0xf]
        %v1156 = vld [vmem:[%s5 + $0xc] sm:$0xf]
        %v1157 = vld [vmem:[%s5 + $0x10] sm:$0xf]
        %v1158 = vld [vmem:[%s5 + $0x14] sm:$0xf]
        %v1159 = vld [vmem:[%s5 + $0x18] sm:$0xf]
        %v1160 = vld [vmem:[%s5 + $0x1c] sm:$0xf]
        %v1161 = vld [vmem:[%s6] sm:$0x1]
        %v1163 = vlaneseq
        %v1164 = vshrl.u32 %v1163, 7
        %v1165 = vsub.s32 0, %v1164
        %v1166 = vrot.slane %v1161, %v1165
        %v1176 = vunpack.c.l.b16 %v1153
        %v1177 = vunpack.c.l.b16 %v1154
        %v1178 = vunpack.c.l.b16 %v1155
        %v1179 = vunpack.c.l.b16 %v1156
        %v1180 = vunpack.c.l.b16 %v1157
        %v1181 = vunpack.c.l.b16 %v1158
        %v1182 = vunpack.c.l.b16 %v1159
        %v1183 = vunpack.c.l.b16 %v1160
        %v1184 = vpack.c.b16 %v1177, %v1176
        %v1185 = vpack.c.b16 %v1179, %v1178
        %v1186 = vpack.c.b16 %v1181, %v1180
        %v1187 = vpack.c.b16 %v1183, %v1182
        %vm1192 = vcmask 523264
        %v1194 = vsel %vm1192, %v1152, 0
        %1196 = vmatprep.subr.bf16.mxu0 0
        %1197 = vmatpush1.bf16.msra.mxu0 %v1184
        %1198 = vmatprep.subr.bf16.mxu0 0
        %1199 = vmatpush1.bf16.msra.mxu0 %v1185
        %1200 = vmatprep.subr.bf16.mxu0 0
        %1201 = vmatpush1.bf16.msra.mxu0 %v1186
        %1202 = vmatprep.subr.bf16.mxu0 0
        %1203 = vmatpush1.bf16.msra.mxu0 %v1187
        %1204 = vmatprep.subr.bf16.mxu0 0
        %1205 = vmatpush1.bf16.msra.mxu0 0
        %1206 = vmatprep.subr.bf16.mxu0 0
        %1207 = vmatpush1.bf16.msra.mxu0 0
        %1208 = vmatprep.subr.bf16.mxu0 0
        %1209 = vmatpush1.bf16.msra.mxu0 0
        %1210 = vmatprep.subr.bf16.mxu0 0
        %1211 = vmatpush1.bf16.msra.mxu0 0
        %1212 = vmatprep.subr.bf16.mxu0 0
        %1213 = vmatpush1.bf16.msra.mxu0 0
        %1214 = vmatprep.subr.bf16.mxu0 0
        %1215 = vmatpush1.bf16.msra.mxu0 0
        %1216 = vmatprep.subr.bf16.mxu0 0
        %1217 = vmatpush1.bf16.msra.mxu0 0
        %1218 = vmatprep.subr.bf16.mxu0 0
        %1219 = vmatpush1.bf16.msra.mxu0 0
        %1220 = vmatprep.subr.bf16.mxu0 0
        %1221 = vmatpush1.bf16.msra.mxu0 0
        %1222 = vmatprep.subr.bf16.mxu0 0
        %1223 = vmatpush1.bf16.msra.mxu0 0
        %1224 = vmatprep.subr.bf16.mxu0 0
        %1225 = vmatpush1.bf16.msra.mxu0 0
        %1226 = vmatprep.subr.bf16.mxu0 0
        %1227 = vmatpush1.bf16.msra.mxu0 0
        %1228 = vmatprep.mubr.bf16.mxu0 0
        %1229 = vmatmul.mubr.bf16.gmra.mrb[0].mxu0 %v1194
        %v1230 = vpop.f32.mrb[0].mxu0
        %v1231 = vadd.f32 %v1166, %v1230
        %v1232 = vpop.f32.mrb[0].mxu0
        %v1233 = vpop.f32.mrb[0].mxu0
        %v1234 = vadd.f32 %v1166, %v1233
        %v1235 = vpop.f32.mrb[0].mxu0
        %1236 = vdwg.mxu0
        %v1237 = vtanh.pop %v1231
        %v1238 = vtanh.pop %v1234
        %vm1239 = vcmask 15360
        %1240 = vst.msk [vmem:[%s315] sm:$0xff] %vm1239, %v1237
        %1241 = vst.msk [vmem:[%s315 + $0x8] sm:$0xff] %vm1239, %v1238
        %s1242 = sand.u32 %s182, 1
        %s1243 = sand.u32 %s182, 1
        %s1244 = smul.addr %s1243, 16
        %s1245 = scalar_lea.vmem [#allocation6], %s1244
        // Predicated region
        $region57: #{tpu_custom_call.1} parent=47 // pred_check
          %p1246 = pneg %p192
        $region58: #{tpu_custom_call.1} parent=47 // pred_check_branch
          %1248 = sbr.rel (%p1246) target = $region60
        $region59: #{tpu_custom_call.1} parent=47 // pred_region
          %s1249 = smul.u32 2, %s22
          %s1250 = ssub.s32 5, %s1249
          %p1251 = scmp.lt.s32.totalorder %s1250, 2
          %s1252 = scalar_select %p1251, %s1250, 2
          %s1253 = smul.u32 128, %s1252
          %p1254 = scmp.ne.s32.totalorder 0, %s1253
          %s1255 = smul.addr %s1249, 8
          %s1256 = scalar_lea.vmem %s7, %s1255
          // Predicated region
          $region61: #{tpu_custom_call.1} parent=59 // pred_check
            %p1257 = pneg %p1254
          $region62: #{tpu_custom_call.1} parent=59 // pred_check_branch
            %1259 = sbr.rel (%p1257) target = $region64
          $region63: #{tpu_custom_call.1} parent=59 // pred_region
            // Predicated region
            $region65: #{tpu_custom_call.1} parent=63 // pred_check
              _
            $region66: #{tpu_custom_call.1} parent=63 // pred_check_branch
              %1261 = sbr.rel (0) target = $region68
            $region67: #{tpu_custom_call.1} parent=63 // pred_region
              // Predicated region
              $region87: #{tpu_custom_call.1} parent=67 // pred_check
                _
              $region88: #{tpu_custom_call.1} parent=67 // pred_check_branch
                %1312 = sbr.rel (0) target = $region90
              $region89: #{tpu_custom_call.1} parent=67 // pred_region
                %s1313 = sshrl.u32 %s1252, 1
                // While loop
                $region91: #{tpu_custom_call.1} parent=89 // loop_pre_header
                  _
                $region92: #{tpu_custom_call.1} parent=89 // loop_header
                  %s1315 = sphi 0, %s1317
                  %p1316 = scmp.ge.s32.totalorder %s1315, %s1313
                  %s1320 = sphi 0, %s1329
                  %s1321 = sphi %s1245, %s1332
                  %s1322 = sphi %s1256, %s1333
                $region93: #{tpu_custom_call.1} parent=89 // loop_header_branch
                  %1319 = sbr.rel (%p1316) target = $region97
                $region94: #{tpu_custom_call.1} parent=89 // loop_body
                  %v1323 = vld [vmem:[%s1321] sm:$0xff]
                  %1324 = vst [vmem:[%s1322] sm:$0xff] %v1323
                  %v1325 = vld [vmem:[%s1321 + $0x8] sm:$0xff]
                  %1326 = vst [vmem:[%s1322 + $0x8] sm:$0xff] %v1325
                  %s1327 = sadd.s32 1, %s1320
                  %p1328 = scmp.ge.s32.totalorder %s1327, %s1313
                  %s1329 = scalar_select %p1328, 0, %s1327
                  %s1330 = smul.u32 %s1329, 16
                  %s1331 = smul.u32 %s1329, 16
                  %s1332 = scalar_lea.vmem %s1245, %s1330 [#allocation6]
                  %s1333 = scalar_lea.vmem %s1256, %s1331
                $region95: #{tpu_custom_call.1} parent=89 // loop_footer
                  %s1317 = sadd.s32 %s1315, 1
                $region96: #{tpu_custom_call.1} parent=89 // loop_footer_branch
                  %1314 = sbr.rel target = $region92
                $region97: #{tpu_custom_call.1} parent=89 // loop_exit
                  _
                %s1334 = sshrl.u32 %s1252, 1
                %s1335 = sand.u32 %s1252, 1
                %s1336 = smul.u32 %s1334, 2
                %s1337 = smul.u32 8, %s1336
                %s1338 = scalar_lea.vmem %s1245, %s1337 [#allocation6]
                %s1339 = smul.u32 8, %s1336
                %s1340 = scalar_lea.vmem %s1256, %s1339
                // While loop
                $region98: #{tpu_custom_call.1} parent=89 // loop_pre_header
                  _
                $region99: #{tpu_custom_call.1} parent=89 // loop_header
                  %s1342 = sphi 0, %s1344
                  %p1343 = scmp.ge.s32.totalorder %s1342, %s1335
                  %s1347 = sphi 0, %s1354
                  %s1348 = sphi %s1338, %s1357
                  %s1349 = sphi %s1340, %s1358
                $region100: #{tpu_custom_call.1} parent=89 // loop_header_branch
                  %1346 = sbr.rel (%p1343) target = $region104
                $region101: #{tpu_custom_call.1} parent=89 // loop_body
                  %v1350 = vld [vmem:[%s1348] sm:$0xff]
                  %1351 = vst [vmem:[%s1349] sm:$0xff] %v1350
                  %s1352 = sadd.s32 1, %s1347
                  %p1353 = scmp.ge.s32.totalorder %s1352, %s1335
                  %s1354 = scalar_select %p1353, 0, %s1352
                  %s1355 = smul.u32 %s1354, 8
                  %s1356 = smul.u32 %s1354, 8
                  %s1357 = scalar_lea.vmem %s1338, %s1355 [#allocation6]
                  %s1358 = scalar_lea.vmem %s1340, %s1356
                $region102: #{tpu_custom_call.1} parent=89 // loop_footer
                  %s1344 = sadd.s32 %s1342, 1
                $region103: #{tpu_custom_call.1} parent=89 // loop_footer_branch
                  %1341 = sbr.rel target = $region99
                $region104: #{tpu_custom_call.1} parent=89 // loop_exit
                  _
              $region90: #{tpu_custom_call.1} parent=67 // pred_fallthru
                _
              // Predicated region
              $region105: #{tpu_custom_call.1} parent=67 // pred_check
                _
              $region106: #{tpu_custom_call.1} parent=67 // pred_check_branch
                %1360 = sbr.rel target = $region108
              $region107: #{tpu_custom_call.1} parent=67 // pred_region
                _
              $region108: #{tpu_custom_call.1} parent=67 // pred_fallthru
                _
            $region68: #{tpu_custom_call.1} parent=63 // pred_fallthru
              _
            // Predicated region
            $region69: #{tpu_custom_call.1} parent=63 // pred_check
              _
            $region70: #{tpu_custom_call.1} parent=63 // pred_check_branch
              %1263 = sbr.rel target = $region72
            $region71: #{tpu_custom_call.1} parent=63 // pred_region
              %s1265 = sshrl.u32 %s1252, 1
              // While loop
              $region73: #{tpu_custom_call.1} parent=71 // loop_pre_header
                _
              $region74: #{tpu_custom_call.1} parent=71 // loop_header
                %s1267 = sphi 0, %s1269
                %p1268 = scmp.ge.s32.totalorder %s1267, %s1265
                %s1272 = sphi 0, %s1281
                %s1273 = sphi %s1245, %s1284
                %s1274 = sphi %s1256, %s1285
              $region75: #{tpu_custom_call.1} parent=71 // loop_header_branch
                %1271 = sbr.rel (%p1268) target = $region79
              $region76: #{tpu_custom_call.1} parent=71 // loop_body
                %v1275 = vld [vmem:[%s1273] sm:$0xff]
                %1276 = vst [vmem:[%s1274] sm:$0xff] %v1275
                %v1277 = vld [vmem:[%s1273 + $0x8] sm:$0xff]
                %1278 = vst [vmem:[%s1274 + $0x8] sm:$0xff] %v1277
                %s1279 = sadd.s32 1, %s1272
                %p1280 = scmp.ge.s32.totalorder %s1279, %s1265
                %s1281 = scalar_select %p1280, 0, %s1279
                %s1282 = smul.u32 %s1281, 16
                %s1283 = smul.u32 %s1281, 16
                %s1284 = scalar_lea.vmem %s1245, %s1282 [#allocation6]
                %s1285 = scalar_lea.vmem %s1256, %s1283
              $region77: #{tpu_custom_call.1} parent=71 // loop_footer
                %s1269 = sadd.s32 %s1267, 1
              $region78: #{tpu_custom_call.1} parent=71 // loop_footer_branch
                %1266 = sbr.rel target = $region74
              $region79: #{tpu_custom_call.1} parent=71 // loop_exit
                _
              %s1286 = sshrl.u32 %s1252, 1
              %s1287 = sand.u32 %s1252, 1
              %s1288 = smul.u32 %s1286, 2
              %s1289 = smul.u32 8, %s1288
              %s1290 = scalar_lea.vmem %s1245, %s1289 [#allocation6]
              %s1291 = smul.u32 8, %s1288
              %s1292 = scalar_lea.vmem %s1256, %s1291
              // While loop
              $region80: #{tpu_custom_call.1} parent=71 // loop_pre_header
                _
              $region81: #{tpu_custom_call.1} parent=71 // loop_header
                %s1294 = sphi 0, %s1296
                %p1295 = scmp.ge.s32.totalorder %s1294, %s1287
                %s1299 = sphi 0, %s1306
                %s1300 = sphi %s1290, %s1309
                %s1301 = sphi %s1292, %s1310
              $region82: #{tpu_custom_call.1} parent=71 // loop_header_branch
                %1298 = sbr.rel (%p1295) target = $region86
              $region83: #{tpu_custom_call.1} parent=71 // loop_body
                %v1302 = vld [vmem:[%s1300] sm:$0xff]
                %1303 = vst [vmem:[%s1301] sm:$0xff] %v1302
                %s1304 = sadd.s32 1, %s1299
                %p1305 = scmp.ge.s32.totalorder %s1304, %s1287
                %s1306 = scalar_select %p1305, 0, %s1304
                %s1307 = smul.u32 %s1306, 8
                %s1308 = smul.u32 %s1306, 8
                %s1309 = scalar_lea.vmem %s1290, %s1307 [#allocation6]
                %s1310 = scalar_lea.vmem %s1292, %s1308
              $region84: #{tpu_custom_call.1} parent=71 // loop_footer
                %s1296 = sadd.s32 %s1294, 1
              $region85: #{tpu_custom_call.1} parent=71 // loop_footer_branch
                %1293 = sbr.rel target = $region81
              $region86: #{tpu_custom_call.1} parent=71 // loop_exit
                _
            $region72: #{tpu_custom_call.1} parent=63 // pred_fallthru
              _
          $region64: #{tpu_custom_call.1} parent=59 // pred_fallthru
            _
          %1361 = vnop
        $region60: #{tpu_custom_call.1} parent=47 // pred_fallthru
          _
      $region48: #{tpu_custom_call.1} parent=5 // pred_fallthru
        _
      %p1362 = scmp.le.s32.totalorder 2, %s17
      // Predicated region
      $region109: #{tpu_custom_call.1} parent=5 // pred_check
        %p1363 = pneg %p1362
      $region110: #{tpu_custom_call.1} parent=5 // pred_check_branch
        %1365 = sbr.rel (%p1363) target = $region112
      $region111: #{tpu_custom_call.1} parent=5 // pred_region
        %s1366 = ssub.s32 %s17, 2
        // Predicated region
        $region113: #{tpu_custom_call.1} parent=111 // pred_check
          %p1367 = pneg %p198
        $region114: #{tpu_custom_call.1} parent=111 // pred_check_branch
          %1369 = sbr.rel (%p1367) target = $region116
        $region115: #{tpu_custom_call.1} parent=111 // pred_region
          %s1370 = sand.u32 %s183, 1
          %s1371 = sand.u32 %s183, 1
          %s1372 = smul.addr %s1371, 16
          %s1373 = scalar_lea.vmem [#allocation6], %s1372
        $region116: #{tpu_custom_call.1} parent=111 // pred_fallthru
          _
      $region112: #{tpu_custom_call.1} parent=5 // pred_fallthru
        _
    $region6: #{tpu_custom_call.1} parent=1 // loop_footer
      %s21 = sadd.s32 1, %s17
    $region7: #{tpu_custom_call.1} parent=1 // loop_footer_branch
      %16 = sbr.rel target = $region3
    $region8: #{tpu_custom_call.1} parent=1 // loop_exit
      _
    %1374 = vsyncpa [#allocation3], 1
    %s1375 = scalar_lea.sflag [#allocation3], 1
    %1376 = vsyncpa %s1375, 1
    %1377 = vsyncpa [#allocation5], 1

</llo_original>
